<compile_context>
chip_gen: v7x
topology: tpu7x:2x2x1
jax: 0.10.0
libtpu: 0.0.40
codegen_flags: <defaults>
</compile_context>

<pallas_src>
import functools

import jax
import jax.numpy as jnp
from jax.experimental import pallas as pl
from jax.experimental.pallas import tpu as pltpu

GIN_EPS = 0.0      # GINConv init_eps (default, not learnable)
LN_EPS = 1e-5      # nn.LayerNorm default eps
NEG_INF = -1e30
BIG = 1e30         # additive-mask magnitude ((adj - 1) * BIG)

LANE = 128         # TPU lane width
SUBLANE = 8        # TPU sublane width
ROW_TILE = 64      # destination-node rows per grid step (multiple of 8)
SRC_TILE = 512     # source-node columns per grid step (multiple of 128 when tiled)
SRC_CHUNK = 8      # sublane chunk size for the masked-max reduction


def _round_up(x, m):
    return ((x + m - 1) // m) * m


def gin_layer_kernel(adj_ref, hsrc_ref, hself_ref, w_ref, b_ref, gamma_ref,
                     beta_ref, out_ref, acc_ref, deg_ref, *, nhid):
    k = pl.program_id(1)

    # ---- init running-max / degree accumulators on the first source tile ----
    @pl.when(k == 0)
    def _init():
        acc_ref[...] = jnp.full_like(acc_ref, NEG_INF)
        deg_ref[...] = jnp.zeros_like(deg_ref)

    tn, f_pad = acc_ref.shape
    tj = adj_ref.shape[1]

    # Additive mask, computed once per (tn, tj) tile: 0 where an edge exists,
    # -BIG where it does not.  candidate = h_src + madd  (no select, no bool mask).
    madd = (adj_ref[...] - 1.0) * BIG

    # ---- blocked 'max' neighbor aggregation over this source tile ----
    m = acc_ref[...]
    for c in range(tj // SRC_CHUNK):                   # small static chunk loop
        lo = c * SRC_CHUNK
        hi = lo + SRC_CHUNK
        cand = (hsrc_ref[lo:hi, :][None, :, :]         # (1,  CJ, F) source feats
                + madd[:, lo:hi][:, :, None])          # (tn, CJ, 1) additive mask
        m = jnp.maximum(m, jnp.max(cand, axis=1))      # chunk reduce (XLU) + running max
    acc_ref[...] = m
    deg_ref[...] = deg_ref[...] + jnp.sum(adj_ref[...], axis=-1, keepdims=True)

    # ---- epilogue on the last source tile: degree mask, linear, relu, LayerNorm ----
    @pl.when(k == pl.num_programs(1) - 1)
    def _finalize():
        agg = jnp.where(deg_ref[...] > 0.0, acc_ref[...], 0.0)      # isolated -> 0
        rst = (1.0 + GIN_EPS) * hself_ref[...] + agg                # (tn, F)

        z = jnp.dot(rst, w_ref[...], preferred_element_type=jnp.float32)
        z = jnp.maximum(z + b_ref[...], 0.0)                        # (tn, H_pad)

        # LayerNorm over the true nhid lanes only (output is lane-padded).
        h_pad = z.shape[-1]
        lane_idx = jax.lax.broadcasted_iota(jnp.int32, (1, h_pad), 1)
        lmask = (lane_idx < nhid).astype(jnp.float32)
        inv_h = 1.0 / float(nhid)
        mean = jnp.sum(z * lmask, axis=-1, keepdims=True) * inv_h
        d = (z - mean) * lmask
        var = jnp.sum(d * d, axis=-1, keepdims=True) * inv_h
        zn = d * jax.lax.rsqrt(var + LN_EPS)
        out_ref[...] = zn * gamma_ref[...] + beta_ref[...]


def gin_layer_forward(adj, h, w, b, gamma, beta):
    n, f = h.shape
    nhid = w.shape[1]

    # Lane-dense padding of feature / hidden dims; sublane padding of nodes.
    f_pad = _round_up(f, LANE)
    hid_pad = _round_up(nhid, LANE)

    if n <= ROW_TILE:
        n_pad = _round_up(n, SUBLANE)
        tn = n_pad
    else:
        n_pad = _round_up(n, ROW_TILE)
        tn = ROW_TILE
    if n_pad <= SRC_TILE:
        tj = n_pad
    else:
        n_pad = _round_up(n_pad, SRC_TILE)
        tj = SRC_TILE

    f32 = jnp.float32
    adj_p = jnp.zeros((n_pad, n_pad), f32).at[:n, :n].set(adj.astype(f32))
    h_p = jnp.zeros((n_pad, f_pad), f32).at[:n, :f].set(h.astype(f32))
    w_p = jnp.zeros((f_pad, hid_pad), f32).at[:f, :nhid].set(w.astype(f32))
    b_p = jnp.zeros((1, hid_pad), f32).at[:, :nhid].set(jnp.reshape(b, (1, nhid)).astype(f32))
    g_p = jnp.zeros((1, hid_pad), f32).at[:, :nhid].set(jnp.reshape(gamma, (1, nhid)).astype(f32))
    be_p = jnp.zeros((1, hid_pad), f32).at[:, :nhid].set(jnp.reshape(beta, (1, nhid)).astype(f32))

    grid = (n_pad // tn, n_pad // tj)

    out = pl.pallas_call(
        functools.partial(gin_layer_kernel, nhid=nhid),
        out_shape=jax.ShapeDtypeStruct((n_pad, hid_pad), f32),
        grid_spec=pltpu.PrefetchScalarGridSpec(
            num_scalar_prefetch=0,
            grid=grid,
            in_specs=[
                pl.BlockSpec((tn, tj), lambda i, k: (i, k)),          # adj tile
                pl.BlockSpec((tj, f_pad), lambda i, k: (k, 0)),       # h (source rows)
                pl.BlockSpec((tn, f_pad), lambda i, k: (i, 0)),       # h (self rows)
                pl.BlockSpec((f_pad, hid_pad), lambda i, k: (0, 0)),  # W
                pl.BlockSpec((1, hid_pad), lambda i, k: (0, 0)),      # b
                pl.BlockSpec((1, hid_pad), lambda i, k: (0, 0)),      # gamma
                pl.BlockSpec((1, hid_pad), lambda i, k: (0, 0)),      # beta
            ],
            out_specs=pl.BlockSpec((tn, hid_pad), lambda i, k: (i, 0)),
            scratch_shapes=[
                pltpu.VMEM((tn, f_pad), jnp.float32),   # running max accumulator
                pltpu.VMEM((tn, 1), jnp.float32),       # running in-degree
            ],
        ),
        compiler_params=pltpu.CompilerParams(
            dimension_semantics=("parallel", "arbitrary"),
            vmem_limit_bytes=32 * 1024 * 1024,
        ),
    )(adj_p, h_p, h_p, w_p, b_p, g_p, be_p)

    return out[:n, :nhid]


def gin_layer_ref(adj, h, w, b, gamma, beta):
    """Pure-JAX reference with identical semantics."""
    cand = jnp.where(adj[:, :, None] > 0.0, h[None, :, :], NEG_INF)
    agg = jnp.max(cand, axis=1)
    deg = jnp.sum(adj, axis=1, keepdims=True)
    agg = jnp.where(deg > 0.0, agg, 0.0)
    rst = (1.0 + GIN_EPS) * h + agg
    z = jnp.maximum(jnp.dot(rst, w) + b, 0.0)
    mean = jnp.mean(z, axis=-1, keepdims=True)
    var = jnp.mean((z - mean) ** 2, axis=-1, keepdims=True)
    return (z - mean) * jax.lax.rsqrt(var + LN_EPS) * gamma + beta


if __name__ == "__main__":
    N, NFEAT, NHID = 8, 16, 32

    key = jax.random.PRNGKey(0)
    k_adj, k_h, k_w, k_b = jax.random.split(key, 4)

    # Random directed graph with self-loops, dense adjacency (adj[i, j]: edge j->i).
    adj = (jax.random.uniform(k_adj, (N, N)) < 0.35).astype(jnp.float32)
    adj = jnp.maximum(adj, jnp.eye(N, dtype=jnp.float32))

    h = jax.random.normal(k_h, (N, NFEAT), dtype=jnp.float32)

    # Deterministic Linear(nfeat, nhid) params (PyTorch-style uniform init range).
    bound = 1.0 / (NFEAT ** 0.5)
    w = jax.random.uniform(k_w, (NFEAT, NHID), minval=-bound, maxval=bound,
                           dtype=jnp.float32)
    b = jax.random.uniform(k_b, (1, NHID), minval=-bound, maxval=bound,
                           dtype=jnp.float32)

    # nn.LayerNorm default affine init.
    gamma = jnp.ones((1, NHID), dtype=jnp.float32)
    beta = jnp.zeros((1, NHID), dtype=jnp.float32)

    out = gin_layer_forward(adj, h, w, b, gamma, beta)
    jax.block_until_ready(out)
    assert out.shape == (N, NHID)

    ref = gin_layer_ref(adj, h, w, b, gamma, beta)
    assert jnp.allclose(out, ref, rtol=1e-3, atol=1e-3), float(jnp.max(jnp.abs(out - ref)))

    print("KERNEL_OK")
</pallas_src>

<mosaic_0001>
module attributes {stable_mosaic.version = 11 : i64} {
  func.func @gin_layer_kernel(%arg0: i32, %arg1: i32, %arg2: memref<8x8xf32, #tpu.memory_space<vmem>>, %arg3: memref<8x128xf32, #tpu.memory_space<vmem>>, %arg4: memref<8x128xf32, #tpu.memory_space<vmem>>, %arg5: memref<128x128xf32, #tpu.memory_space<vmem>>, %arg6: memref<1x128xf32, #tpu.memory_space<vmem>>, %arg7: memref<1x128xf32, #tpu.memory_space<vmem>>, %arg8: memref<1x128xf32, #tpu.memory_space<vmem>>, %arg9: memref<8x128xf32, #tpu.memory_space<vmem>>, %arg10: memref<8x128xf32, #tpu.memory_space<vmem>>, %arg11: memref<8x1xf32, #tpu.memory_space<vmem>>) attributes {dimension_semantics = [#tpu.dimension_semantics<parallel>, #tpu.dimension_semantics<arbitrary>], iteration_bounds = array<i64: 1, 1>, scalar_prefetch = 0 : i64, scratch_operands = 2 : i64, tpu.core_type = #tpu.core_type<tc>, window_params = [{transform_indices = @transform_0, window_bounds = array<i64: 8, 8>}, {transform_indices = @transform_1, window_bounds = array<i64: 8, 128>}, {transform_indices = @transform_2, window_bounds = array<i64: 8, 128>}, {pipeline_mode = #tpu.pipeline_mode<synchronous>, transform_indices = @transform_3, window_bounds = array<i64: 128, 128>}, {pipeline_mode = #tpu.pipeline_mode<synchronous>, transform_indices = @transform_4, window_bounds = array<i64: 1, 128>}, {pipeline_mode = #tpu.pipeline_mode<synchronous>, transform_indices = @transform_5, window_bounds = array<i64: 1, 128>}, {pipeline_mode = #tpu.pipeline_mode<synchronous>, transform_indices = @transform_6, window_bounds = array<i64: 1, 128>}, {transform_indices = @transform_7, window_bounds = array<i64: 8, 128>}]} {
    %c0_i32 = arith.constant 0 : i32
    %0 = arith.cmpi eq, %arg1, %c0_i32 : i32
    %1 = arith.extui %0 : i1 to i32
    %c0_i32_0 = arith.constant 0 : i32
    %2 = arith.cmpi ne, %1, %c0_i32_0 : i32
    scf.if %2 {
      %cst_19 = arith.constant -1.000000e+30 : f32
      %27 = vector.broadcast %cst_19 : f32 to vector<8x128xf32>
      %c0_20 = arith.constant 0 : index
      %c0_21 = arith.constant 0 : index
      %28 = vector.load %arg10[%c0_20, %c0_21] : memref<8x128xf32, #tpu.memory_space<vmem>>, vector<8x128xf32>
      tpu.vector_store %arg10[%c0_20, %c0_21], %27 {strides = array<i32>} : memref<8x128xf32, #tpu.memory_space<vmem>>, vector<8x128xf32>,
      %cst_22 = arith.constant 0.000000e+00 : f32
      %29 = vector.broadcast %cst_22 : f32 to vector<8x1xf32>
      %c0_23 = arith.constant 0 : index
      %c0_24 = arith.constant 0 : index
      %30 = vector.load %arg11[%c0_23, %c0_24] : memref<8x1xf32, #tpu.memory_space<vmem>>, vector<8x1xf32>
      tpu.vector_store %arg11[%c0_23, %c0_24], %29 {strides = array<i32>} : memref<8x1xf32, #tpu.memory_space<vmem>>, vector<8x1xf32>,
    } else {
    }
    %c0 = arith.constant 0 : index
    %c0_1 = arith.constant 0 : index
    %3 = vector.load %arg2[%c0, %c0_1] : memref<8x8xf32, #tpu.memory_space<vmem>>, vector<8x8xf32>
    %cst = arith.constant 1.000000e+00 : f32
    %4 = vector.broadcast %cst : f32 to vector<8x8xf32>
    %5 = arith.subf %3, %4 : vector<8x8xf32>
    %cst_2 = arith.constant 1.000000e+30 : f32
    %6 = vector.broadcast %cst_2 : f32 to vector<8x8xf32>
    %7 = arith.mulf %5, %6 : vector<8x8xf32>
    %c0_3 = arith.constant 0 : index
    %c0_4 = arith.constant 0 : index
    %8 = vector.load %arg10[%c0_3, %c0_4] : memref<8x128xf32, #tpu.memory_space<vmem>>, vector<8x128xf32>
    %c0_5 = arith.constant 0 : index
    %c0_6 = arith.constant 0 : index
    %9 = vector.load %arg3[%c0_5, %c0_6] : memref<8x128xf32, #tpu.memory_space<vmem>>, vector<8x128xf32>
    %10 = vector.shape_cast %9 : vector<8x128xf32> to vector<1x8x128xf32>
    %11 = vector.shape_cast %7 : vector<8x8xf32> to vector<8x8x1xf32>
    %12 = vector.broadcast %10 : vector<1x8x128xf32> to vector<8x8x128xf32>
    %13 = vector.broadcast %11 : vector<8x8x1xf32> to vector<8x8x128xf32>
    %14 = arith.addf %12, %13 : vector<8x8x128xf32>
    %cst_7 = arith.constant dense<0xFF800000> : vector<8x128xf32>
    %15 = vector.multi_reduction <maximumf>, %14, %cst_7 [1] : vector<8x8x128xf32> to vector<8x128xf32>
    %16 = arith.maximumf %8, %15 : vector<8x128xf32>
    %c0_8 = arith.constant 0 : index
    %c0_9 = arith.constant 0 : index
    %17 = vector.load %arg10[%c0_8, %c0_9] : memref<8x128xf32, #tpu.memory_space<vmem>>, vector<8x128xf32>
    tpu.vector_store %arg10[%c0_8, %c0_9], %16 {strides = array<i32>} : memref<8x128xf32, #tpu.memory_space<vmem>>, vector<8x128xf32>,
    %c0_10 = arith.constant 0 : index
    %c0_11 = arith.constant 0 : index
    %18 = vector.load %arg11[%c0_10, %c0_11] : memref<8x1xf32, #tpu.memory_space<vmem>>, vector<8x1xf32>
    %c0_12 = arith.constant 0 : index
    %c0_13 = arith.constant 0 : index
    %19 = vector.load %arg2[%c0_12, %c0_13] : memref<8x8xf32, #tpu.memory_space<vmem>>, vector<8x8xf32>
    %cst_14 = arith.constant dense<0.000000e+00> : vector<8xf32>
    %20 = vector.multi_reduction <add>, %19, %cst_14 [1] : vector<8x8xf32> to vector<8xf32>
    %21 = vector.shape_cast %20 : vector<8xf32> to vector<8x1xf32>
    %22 = arith.addf %18, %21 : vector<8x1xf32>
    %c0_15 = arith.constant 0 : index
    %c0_16 = arith.constant 0 : index
    %23 = vector.load %arg11[%c0_15, %c0_16] : memref<8x1xf32, #tpu.memory_space<vmem>>, vector<8x1xf32>
    tpu.vector_store %arg11[%c0_15, %c0_16], %22 {strides = array<i32>} : memref<8x1xf32, #tpu.memory_space<vmem>>, vector<8x1xf32>,
    %c0_i32_17 = arith.constant 0 : i32
    %24 = arith.cmpi eq, %arg1, %c0_i32_17 : i32
    %25 = arith.extui %24 : i1 to i32
    %c0_i32_18 = arith.constant 0 : i32
    %26 = arith.cmpi ne, %25, %c0_i32_18 : i32
    scf.if %26 {
      %c0_19 = arith.constant 0 : index
      %c0_20 = arith.constant 0 : index
      %27 = vector.load %arg11[%c0_19, %c0_20] : memref<8x1xf32, #tpu.memory_space<vmem>>, vector<8x1xf32>
      %cst_21 = arith.constant 0.000000e+00 : f32
      %28 = vector.broadcast %cst_21 : f32 to vector<8x1xf32>
      %29 = arith.cmpf ogt, %27, %28 : vector<8x1xf32>
      %c0_22 = arith.constant 0 : index
      %c0_23 = arith.constant 0 : index
      %30 = vector.load %arg10[%c0_22, %c0_23] : memref<8x128xf32, #tpu.memory_space<vmem>>, vector<8x128xf32>
      %cst_24 = arith.constant 0.000000e+00 : f32
      %31 = vector.shape_cast %29 : vector<8x1xi1> to vector<8x1xi1>
      %32 = vector.broadcast %31 : vector<8x1xi1> to vector<8x128xi1>
      %33 = vector.broadcast %cst_24 : f32 to vector<8x128xf32>
      %34 = arith.select %32, %30, %33 : vector<8x128xi1>, vector<8x128xf32>
      %c0_25 = arith.constant 0 : index
      %c0_26 = arith.constant 0 : index
      %35 = vector.load %arg4[%c0_25, %c0_26] : memref<8x128xf32, #tpu.memory_space<vmem>>, vector<8x128xf32>
      %cst_27 = arith.constant 1.000000e+00 : f32
      %36 = vector.broadcast %cst_27 : f32 to vector<8x128xf32>
      %37 = arith.mulf %36, %35 : vector<8x128xf32>
      %38 = arith.addf %37, %34 : vector<8x128xf32>
      %c0_28 = arith.constant 0 : index
      %c0_29 = arith.constant 0 : index
      %39 = vector.load %arg5[%c0_28, %c0_29] : memref<128x128xf32, #tpu.memory_space<vmem>>, vector<128x128xf32>
      %cst_30 = arith.constant dense<0.000000e+00> : vector<8x128xf32>
      %40 = tpu.matmul %38, %39, %cst_30 {dimension_numbers = #tpu.dot_dimension_numbers<[1], [0], [0], [1], [0, 0, 1, 1], [], []>} : vector<8x128xf32>, vector<128x128xf32>, vector<8x128xf32> -> vector<8x128xf32>
      %c0_31 = arith.constant 0 : index
      %c0_32 = arith.constant 0 : index
      %41 = vector.load %arg6[%c0_31, %c0_32] : memref<1x128xf32, #tpu.memory_space<vmem>>, vector<1x128xf32>
      %42 = vector.broadcast %41 : vector<1x128xf32> to vector<8x128xf32>
      %43 = arith.addf %40, %42 : vector<8x128xf32>
      %cst_33 = arith.constant 0.000000e+00 : f32
      %44 = vector.broadcast %cst_33 : f32 to vector<8x128xf32>
      %45 = arith.maximumf %43, %44 : vector<8x128xf32>
      %46 = tpu.iota {dimensions = array<i32: 1>} : vector<1x128xi32>
      %c32_i32 = arith.constant 32 : i32
      %47 = vector.broadcast %c32_i32 : i32 to vector<1x128xi32>
      %48 = arith.cmpi slt, %46, %47 : vector<1x128xi32>
      %49 = arith.extui %48 : vector<1x128xi1> to vector<1x128xi32>
      %50 = arith.sitofp %49 : vector<1x128xi32> to vector<1x128xf32>
      %51 = vector.broadcast %50 : vector<1x128xf32> to vector<8x128xf32>
      %52 = arith.mulf %45, %51 : vector<8x128xf32>
      %cst_34 = arith.constant dense<0.000000e+00> : vector<8xf32>
      %53 = vector.multi_reduction <add>, %52, %cst_34 [1] : vector<8x128xf32> to vector<8xf32>
      %54 = vector.shape_cast %53 : vector<8xf32> to vector<8x1xf32>
      %cst_35 = arith.constant 3.125000e-02 : f32
      %55 = vector.broadcast %cst_35 : f32 to vector<8x1xf32>
      %56 = arith.mulf %54, %55 : vector<8x1xf32>
      %57 = vector.broadcast %56 : vector<8x1xf32> to vector<8x128xf32>
      %58 = arith.subf %45, %57 : vector<8x128xf32>
      %59 = vector.broadcast %50 : vector<1x128xf32> to vector<8x128xf32>
      %60 = arith.mulf %58, %59 : vector<8x128xf32>
      %61 = arith.mulf %60, %60 : vector<8x128xf32>
      %cst_36 = arith.constant dense<0.000000e+00> : vector<8xf32>
      %62 = vector.multi_reduction <add>, %61, %cst_36 [1] : vector<8x128xf32> to vector<8xf32>
      %63 = vector.shape_cast %62 : vector<8xf32> to vector<8x1xf32>
      %cst_37 = arith.constant 3.125000e-02 : f32
      %64 = vector.broadcast %cst_37 : f32 to vector<8x1xf32>
      %65 = arith.mulf %63, %64 : vector<8x1xf32>
      %cst_38 = arith.constant 9.99999974E-6 : f32
      %66 = vector.broadcast %cst_38 : f32 to vector<8x1xf32>
      %67 = arith.addf %65, %66 : vector<8x1xf32>
      %68 = math.rsqrt %67 : vector<8x1xf32>
      %69 = vector.broadcast %68 : vector<8x1xf32> to vector<8x128xf32>
      %70 = arith.mulf %60, %69 : vector<8x128xf32>
      %c0_39 = arith.constant 0 : index
      %c0_40 = arith.constant 0 : index
      %71 = vector.load %arg7[%c0_39, %c0_40] : memref<1x128xf32, #tpu.memory_space<vmem>>, vector<1x128xf32>
      %72 = vector.broadcast %71 : vector<1x128xf32> to vector<8x128xf32>
      %73 = arith.mulf %70, %72 : vector<8x128xf32>
      %c0_41 = arith.constant 0 : index
      %c0_42 = arith.constant 0 : index
      %74 = vector.load %arg8[%c0_41, %c0_42] : memref<1x128xf32, #tpu.memory_space<vmem>>, vector<1x128xf32>
      %75 = vector.broadcast %74 : vector<1x128xf32> to vector<8x128xf32>
      %76 = arith.addf %73, %75 : vector<8x128xf32>
      %c0_43 = arith.constant 0 : index
      %c0_44 = arith.constant 0 : index
      %77 = vector.load %arg9[%c0_43, %c0_44] : memref<8x128xf32, #tpu.memory_space<vmem>>, vector<8x128xf32>
      tpu.vector_store %arg9[%c0_43, %c0_44], %76 {strides = array<i32>} : memref<8x128xf32, #tpu.memory_space<vmem>>, vector<8x128xf32>,
    } else {
    }
    return
  }
  func.func @transform_0(%arg0: i32, %arg1: i32) -> (i32, i32) {
    %c0_i32 = arith.constant 0 : i32
    return %arg0, %arg1 : i32, i32
  }
  func.func @transform_1(%arg0: i32, %arg1: i32) -> (i32, i32) {
    %c0_i32 = arith.constant 0 : i32
    %c0_i32_0 = arith.constant 0 : i32
    return %arg1, %c0_i32 : i32, i32
  }
  func.func @transform_2(%arg0: i32, %arg1: i32) -> (i32, i32) {
    %c0_i32 = arith.constant 0 : i32
    %c0_i32_0 = arith.constant 0 : i32
    return %arg0, %c0_i32 : i32, i32
  }
  func.func @transform_3(%arg0: i32, %arg1: i32) -> (i32, i32) {
    %c0_i32 = arith.constant 0 : i32
    %c0_i32_0 = arith.constant 0 : i32
    %c0_i32_1 = arith.constant 0 : i32
    return %c0_i32, %c0_i32_0 : i32, i32
  }
  func.func @transform_4(%arg0: i32, %arg1: i32) -> (i32, i32) {
    %c0_i32 = arith.constant 0 : i32
    %c0_i32_0 = arith.constant 0 : i32
    %c0_i32_1 = arith.constant 0 : i32
    return %c0_i32, %c0_i32_0 : i32, i32
  }
  func.func @transform_5(%arg0: i32, %arg1: i32) -> (i32, i32) {
    %c0_i32 = arith.constant 0 : i32
    %c0_i32_0 = arith.constant 0 : i32
    %c0_i32_1 = arith.constant 0 : i32
    return %c0_i32, %c0_i32_0 : i32, i32
  }
  func.func @transform_6(%arg0: i32, %arg1: i32) -> (i32, i32) {
    %c0_i32 = arith.constant 0 : i32
    %c0_i32_0 = arith.constant 0 : i32
    %c0_i32_1 = arith.constant 0 : i32
    return %c0_i32, %c0_i32_0 : i32, i32
  }
  func.func @transform_7(%arg0: i32, %arg1: i32) -> (i32, i32) {
    %c0_i32 = arith.constant 0 : i32
    %c0_i32_0 = arith.constant 0 : i32
    return %arg0, %c0_i32 : i32, i32
  }
}

</mosaic_0001>

<llo_original>
// kernel: tpu_custom_call.1
$region0: #{tpu_custom_call.1}
  #allocation0 [shape = 'u32[]', space=smem, size = 0x4, offset = 0x4, fixed_abs, tag = 'smem constant byte address 0x4 - core index']
  #allocation1 [shape = 'u32[144,128]{1,0:T(1,128)}', space=vmem, size = 0x12000, scoped, tag = 'internal scratch']
  #allocation2 [shape = 'f32[8,128]{1,0:T(8,128)}', space=vmem, size = 0x1000, scoped, tag = 'scratch operand']
  #allocation3 [shape = 'f32[8,1]{1,0:T(8,128)}', space=vmem, size = 0x1000, scoped, tag = 'scratch operand']
  %s0 = inlined_call_operand.hbm [shape: f32[8,8], index: 0, kind: input, shape index: {}]
  %s1 = inlined_call_operand.hbm [shape: f32[8,128], index: 1, kind: input, shape index: {}]
  %s2 = inlined_call_operand.hbm [shape: f32[8,128], index: 2, kind: input, shape index: {}]
  %s3 = inlined_call_operand.hbm [shape: f32[128,128], index: 3, kind: input, shape index: {}]
  %s4 = inlined_call_operand.vmem [shape: f32[1,128], index: 4, kind: input, shape index: {}]
  %s5 = inlined_call_operand.vmem [shape: f32[1,128], index: 5, kind: input, shape index: {}]
  %s6 = inlined_call_operand.vmem [shape: f32[1,128], index: 6, kind: input, shape index: {}]
  %s7 = inlined_call_operand.hbm [shape: f32[8,128], index: 7, kind: output, shape index: {}]
  %s8 = sld [smem:[#allocation0]]
  $region62: #{tpu_custom_call.1} parent=0
    _
  %s10 = ssub.s32 1, %s8
  %s11 = scalar_select 0, %s10, %s8
  $region1: #{tpu_custom_call.1} parent=0
    #allocation4 [shape = 'u8[4096]{0}', space=vmem, size = 0x1000, scoped, tag = 'input window, operand 0, single buffered']
    #allocation5 [shape = 's32[1]{0}', space=sflag, size = 0x4, scoped, tag = 'scoped memory for tpu_custom_call.1']
    #allocation6 [shape = 's32[1]{0}', space=sflag, size = 0x4, scoped, tag = 'scoped memory for tpu_custom_call.1']
    #allocation7 [shape = 'u8[4096]{0}', space=vmem, size = 0x1000, scoped, tag = 'input window, operand 1, single buffered']
    #allocation8 [shape = 's32[1]{0}', space=sflag, size = 0x4, scoped, tag = 'scoped memory for tpu_custom_call.1']
    #allocation9 [shape = 'u8[4096]{0}', space=vmem, size = 0x1000, scoped, tag = 'input window, operand 2, single buffered']
    #allocation10 [shape = 'u8[65536]{0}', space=vmem, size = 0x10000, scoped, tag = 'input window, operand 3, single buffered']
    #allocation11 [shape = 's32[1]{0}', space=sflag, size = 0x4, scoped, tag = 'scoped memory for tpu_custom_call.1']
    #allocation12 [shape = 'u8[4096]{0}', space=vmem, size = 0x1000, scoped, tag = 'output window, operand 0, single buffered']
    %12 = vsyncpa [#allocation5], 0
    %13 = vsyncpa [#allocation8], 0
    %14 = vsyncpa [#allocation11], 0
    %15 = vsyncpa [#allocation6], 0
    // Predicated region
    $region2: #{tpu_custom_call.1} parent=1 // pred_check
      _
    $region3: #{tpu_custom_call.1} parent=1 // pred_check_branch
      %17 = sbr.rel (0) target = $region5
    $region4: #{tpu_custom_call.1} parent=1 // pred_region
      %s19 = ssub.s32 128, 128
      %20 = vsyncadd [#allocation5], %s19
      %s22 = sshll.u32 [#allocation4], 4
      %s23 = int_to_ptr.vmem [resolvable:$true] %s22
      %25 = dma.hbm_to_vmem [thread:$0]  %s0, 128, %s23, [#allocation5]
    $region5: #{tpu_custom_call.1} parent=1 // pred_fallthru
      _
    // Predicated region
    $region6: #{tpu_custom_call.1} parent=1 // pred_check
      _
    $region7: #{tpu_custom_call.1} parent=1 // pred_check_branch
      %27 = sbr.rel (0) target = $region9
    $region8: #{tpu_custom_call.1} parent=1 // pred_region
      %s29 = ssub.s32 128, 128
      %30 = vsyncadd [#allocation8], %s29
      %s32 = sshll.u32 [#allocation7], 4
      %s33 = int_to_ptr.vmem [resolvable:$true] %s32
      %35 = dma.hbm_to_vmem [thread:$0]  %s1, 128, %s33, [#allocation8]
    $region9: #{tpu_custom_call.1} parent=1 // pred_fallthru
      _
    // Predicated region
    $region10: #{tpu_custom_call.1} parent=1 // pred_check
      _
    $region11: #{tpu_custom_call.1} parent=1 // pred_check_branch
      %37 = sbr.rel (0) target = $region13
    $region12: #{tpu_custom_call.1} parent=1 // pred_region
      %s39 = ssub.s32 128, 128
      %40 = vsyncadd [#allocation8], %s39
      %s42 = sshll.u32 [#allocation9], 4
      %s43 = int_to_ptr.vmem [resolvable:$true] %s42
      %45 = dma.hbm_to_vmem [thread:$0]  %s2, 128, %s43, [#allocation8]
    $region13: #{tpu_custom_call.1} parent=1 // pred_fallthru
      _
    // Predicated region
    $region14: #{tpu_custom_call.1} parent=1 // pred_check
      _
    $region15: #{tpu_custom_call.1} parent=1 // pred_check_branch
      %47 = sbr.rel (0) target = $region17
    $region16: #{tpu_custom_call.1} parent=1 // pred_region
      %s49 = ssub.s32 2048, 2048
      %50 = vsyncadd [#allocation11], %s49
      %s51 = sshll.u32 [#allocation10], 4
      %s52 = int_to_ptr.vmem [resolvable:$true] %s51
      %57 = dma.hbm_to_vmem [thread:$0]  %s3, 2048, %s52, [#allocation11], 128, 128, 8
    $region17: #{tpu_custom_call.1} parent=1 // pred_fallthru
      _
    // Predicated region
    $region18: #{tpu_custom_call.1} parent=1 // pred_check
      _
    $region19: #{tpu_custom_call.1} parent=1 // pred_check_branch
      %59 = sbr.rel (0) target = $region21
    $region20: #{tpu_custom_call.1} parent=1 // pred_region
      _
    $region21: #{tpu_custom_call.1} parent=1 // pred_fallthru
      _
    // Predicated region
    $region22: #{tpu_custom_call.1} parent=1 // pred_check
      _
    $region23: #{tpu_custom_call.1} parent=1 // pred_check_branch
      %61 = sbr.rel (0) target = $region25
    $region24: #{tpu_custom_call.1} parent=1 // pred_region
      _
    $region25: #{tpu_custom_call.1} parent=1 // pred_fallthru
      _
    // Predicated region
    $region26: #{tpu_custom_call.1} parent=1 // pred_check
      _
    $region27: #{tpu_custom_call.1} parent=1 // pred_check_branch
      %63 = sbr.rel (0) target = $region29
    $region28: #{tpu_custom_call.1} parent=1 // pred_region
      _
    $region29: #{tpu_custom_call.1} parent=1 // pred_fallthru
      _
    // Predicated region
    $region30: #{tpu_custom_call.1} parent=1 // pred_check
      _
    $region31: #{tpu_custom_call.1} parent=1 // pred_check_branch
      %65 = sbr.rel (0) target = $region33
    $region32: #{tpu_custom_call.1} parent=1 // pred_region
      %66 = dma.done [#allocation5], 128
    $region33: #{tpu_custom_call.1} parent=1 // pred_fallthru
      _
    // Predicated region
    $region34: #{tpu_custom_call.1} parent=1 // pred_check
      _
    $region35: #{tpu_custom_call.1} parent=1 // pred_check_branch
      %68 = sbr.rel (0) target = $region37
    $region36: #{tpu_custom_call.1} parent=1 // pred_region
      %69 = dma.done [#allocation8], 128
    $region37: #{tpu_custom_call.1} parent=1 // pred_fallthru
      _
    // Predicated region
    $region38: #{tpu_custom_call.1} parent=1 // pred_check
      _
    $region39: #{tpu_custom_call.1} parent=1 // pred_check_branch
      %71 = sbr.rel (0) target = $region41
    $region40: #{tpu_custom_call.1} parent=1 // pred_region
      %72 = dma.done [#allocation8], 128
    $region41: #{tpu_custom_call.1} parent=1 // pred_fallthru
      _
    // Predicated region
    $region42: #{tpu_custom_call.1} parent=1 // pred_check
      _
    $region43: #{tpu_custom_call.1} parent=1 // pred_check_branch
      %74 = sbr.rel (0) target = $region45
    $region44: #{tpu_custom_call.1} parent=1 // pred_region
      %75 = dma.done [#allocation11], 2048
    $region45: #{tpu_custom_call.1} parent=1 // pred_fallthru
      _
    %p76 = scmp.eq.s32.totalorder 0, 0
    // Predicated region
    $region46: #{tpu_custom_call.1} parent=1 // pred_check
      %p77 = pneg %p76
    $region47: #{tpu_custom_call.1} parent=1 // pred_check_branch
      %79 = sbr.rel (%p77) target = $region49
    $region48: #{tpu_custom_call.1} parent=1 // pred_region
      %80 = vst [vmem:[#allocation2] sm:$0xff] -1e+30
      %vm81 = vcmask 7168
      %82 = vst.msk [vmem:[#allocation3] sm:$0xff] %vm81, 0.0
    $region49: #{tpu_custom_call.1} parent=1 // pred_fallthru
      _
    %v83 = vld [vmem:[#allocation4] sm:$0xff]
    %v84 = vsub.f32 %v83, 1.0
    %v85 = vmul.f32 %v84, 1e+30
    %v86 = vld [vmem:[#allocation2] sm:$0xff]
    %v87 = vld [vmem:[#allocation7] sm:$0xff]
    %v88 = vlaneseq
    %v89 = vshrl.u32 %v88, 7
    %v90 = vsub.s32 0, %v89
    %v91 = vrot.slane %v85, %v90
    %93 = vbcast.lane.b32.xlu0 %v91, 256
    %v94 = vpop.permute.xlu0 %93
    %v95 = vlaneseq
    %v96 = vshrl.u32 %v95, 7
    %v97 = vsub.s32 1, %v96
    %v98 = vrot.slane %v85, %v97
    %100 = vbcast.lane.b32.xlu0 %v98, 256
    %v101 = vpop.permute.xlu0 %100
    %v102 = vlaneseq
    %v103 = vshrl.u32 %v102, 7
    %v104 = vsub.s32 2, %v103
    %v105 = vrot.slane %v85, %v104
    %107 = vbcast.lane.b32.xlu0 %v105, 256
    %v108 = vpop.permute.xlu0 %107
    %v109 = vlaneseq
    %v110 = vshrl.u32 %v109, 7
    %v111 = vsub.s32 3, %v110
    %v112 = vrot.slane %v85, %v111
    %114 = vbcast.lane.b32.xlu0 %v112, 256
    %v115 = vpop.permute.xlu0 %114
    %v116 = vlaneseq
    %v117 = vshrl.u32 %v116, 7
    %v118 = vsub.s32 4, %v117
    %v119 = vrot.slane %v85, %v118
    %121 = vbcast.lane.b32.xlu0 %v119, 256
    %v122 = vpop.permute.xlu0 %121
    %v123 = vlaneseq
    %v124 = vshrl.u32 %v123, 7
    %v125 = vsub.s32 5, %v124
    %v126 = vrot.slane %v85, %v125
    %128 = vbcast.lane.b32.xlu0 %v126, 256
    %v129 = vpop.permute.xlu0 %128
    %v130 = vlaneseq
    %v131 = vshrl.u32 %v130, 7
    %v132 = vsub.s32 6, %v131
    %v133 = vrot.slane %v85, %v132
    %135 = vbcast.lane.b32.xlu0 %v133, 256
    %v136 = vpop.permute.xlu0 %135
    %v137 = vlaneseq
    %v138 = vshrl.u32 %v137, 7
    %v139 = vsub.s32 7, %v138
    %v140 = vrot.slane %v85, %v139
    %142 = vbcast.lane.b32.xlu0 %v140, 256
    %v143 = vpop.permute.xlu0 %142
    %v144 = vadd.f32 %v87, %v94
    %v145 = vadd.f32 %v87, %v101
    %v146 = vadd.f32 %v87, %v108
    %v147 = vadd.f32 %v87, %v115
    %v148 = vadd.f32 %v87, %v122
    %v149 = vadd.f32 %v87, %v129
    %v150 = vadd.f32 %v87, %v136
    %v151 = vadd.f32 %v87, %v143
    %v152 = vrot.slane %v144, 4
    %v153 = vmax.f32 %v144, %v152
    %v154 = vrot.slane %v153, 2
    %v155 = vmax.f32 %v153, %v154
    %v156 = vrot.slane %v155, 1
    %v157 = vmax.f32 %v155, %v156
    %v158 = vrot.slane %v145, 4
    %v159 = vmax.f32 %v145, %v158
    %v160 = vrot.slane %v159, 2
    %v161 = vmax.f32 %v159, %v160
    %v162 = vrot.slane %v161, 1
    %v163 = vmax.f32 %v161, %v162
    %v164 = vrot.slane %v146, 4
    %v165 = vmax.f32 %v146, %v164
    %v166 = vrot.slane %v165, 2
    %v167 = vmax.f32 %v165, %v166
    %v168 = vrot.slane %v167, 1
    %v169 = vmax.f32 %v167, %v168
    %v170 = vrot.slane %v147, 4
    %v171 = vmax.f32 %v147, %v170
    %v172 = vrot.slane %v171, 2
    %v173 = vmax.f32 %v171, %v172
    %v174 = vrot.slane %v173, 1
    %v175 = vmax.f32 %v173, %v174
    %v176 = vrot.slane %v148, 4
    %v177 = vmax.f32 %v148, %v176
    %v178 = vrot.slane %v177, 2
    %v179 = vmax.f32 %v177, %v178
    %v180 = vrot.slane %v179, 1
    %v181 = vmax.f32 %v179, %v180
    %v182 = vrot.slane %v149, 4
    %v183 = vmax.f32 %v149, %v182
    %v184 = vrot.slane %v183, 2
    %v185 = vmax.f32 %v183, %v184
    %v186 = vrot.slane %v185, 1
    %v187 = vmax.f32 %v185, %v186
    %v188 = vrot.slane %v150, 4
    %v189 = vmax.f32 %v150, %v188
    %v190 = vrot.slane %v189, 2
    %v191 = vmax.f32 %v189, %v190
    %v192 = vrot.slane %v191, 1
    %v193 = vmax.f32 %v191, %v192
    %v194 = vrot.slane %v151, 4
    %v195 = vmax.f32 %v151, %v194
    %v196 = vrot.slane %v195, 2
    %v197 = vmax.f32 %v195, %v196
    %v198 = vrot.slane %v197, 1
    %v199 = vmax.f32 %v197, %v198
    %vm208 = vcmask 1041409
    %v209 = vsel %vm208, %v163, %v157
    %vm210 = vcmask 1042434
    %v211 = vsel %vm210, %v169, %v209
    %vm212 = vcmask 1043459
    %v213 = vsel %vm212, %v175, %v211
    %vm214 = vcmask 1044484
    %v215 = vsel %vm214, %v181, %v213
    %vm216 = vcmask 1045509
    %v217 = vsel %vm216, %v187, %v215
    %vm218 = vcmask 1046534
    %v219 = vsel %vm218, %v193, %v217
    %vm220 = vcmask 1047559
    %v221 = vsel %vm220, %v199, %v219
    %v223 = vmax.f32 %v86, %v221
    %224 = vst [vmem:[#allocation2] sm:$0xff] %v223
    %v225 = vld [vmem:[#allocation3] sm:$0xff]
    %v226 = vld [vmem:[#allocation4] sm:$0xff]
    %vm227 = vcmask 64512
    %v228 = vsel %vm227, %v226, 0.0
    %229 = vadd.xlane.f32.xlu0 %v228
    %v230 = vpop.xlane.xlu0 %229
    %v231 = vadd.f32 %v225, %v230
    %vm232 = vcmask 7168
    %233 = vst.msk [vmem:[#allocation3] sm:$0xff] %vm232, %v231
    // Predicated region
    $region50: #{tpu_custom_call.1} parent=1 // pred_check
      %p234 = pneg %p76
    $region51: #{tpu_custom_call.1} parent=1 // pred_check_branch
      %236 = sbr.rel (%p234) target = $region53
    $region52: #{tpu_custom_call.1} parent=1 // pred_region
      %v237 = vld [vmem:[#allocation3] sm:$0xff]
      %vm238 = vcmp.gt.f32.partialorder %v237, 0.0
      %v239 = vld [vmem:[#allocation2] sm:$0xff]
      %v240 = vsel %vm238, 1, 0
      %241 = vset.pattern.permute.xlu0 0
      %242 = vperm.xlu0 %241, %v240
      %v243 = vpop.permute.xlu0 %242
      %vm244 = vcmp.eq.s32.totalorder %v243, 1
      %v245 = vsel %vm244, %v239, 0.0
      %v246 = vld [vmem:[#allocation9] sm:$0xff]
      %v247 = vadd.f32 %v246, %v245
      %v248 = vld [vmem:[#allocation10] sm:$0xff]
      %v249 = vld [vmem:[#allocation10 + $0x8] sm:$0xff]
      %v250 = vld [vmem:[#allocation10 + $0x10] sm:$0xff]
      %v251 = vld [vmem:[#allocation10 + $0x18] sm:$0xff]
      %v252 = vld [vmem:[#allocation10 + $0x20] sm:$0xff]
      %v253 = vld [vmem:[#allocation10 + $0x28] sm:$0xff]
      %v254 = vld [vmem:[#allocation10 + $0x30] sm:$0xff]
      %v255 = vld [vmem:[#allocation10 + $0x38] sm:$0xff]
      %v256 = vld [vmem:[#allocation10 + $0x40] sm:$0xff]
      %v257 = vld [vmem:[#allocation10 + $0x48] sm:$0xff]
      %v258 = vld [vmem:[#allocation10 + $0x50] sm:$0xff]
      %v259 = vld [vmem:[#allocation10 + $0x58] sm:$0xff]
      %v260 = vld [vmem:[#allocation10 + $0x60] sm:$0xff]
      %v261 = vld [vmem:[#allocation10 + $0x68] sm:$0xff]
      %v262 = vld [vmem:[#allocation10 + $0x70] sm:$0xff]
      %v263 = vld [vmem:[#allocation10 + $0x78] sm:$0xff]
      %v264 = vld [vmem:[%s4] sm:$0x1]
      %v266 = vlaneseq
      %v267 = vshrl.u32 %v266, 7
      %v268 = vsub.s32 0, %v267
      %v269 = vrot.slane %v264, %v268
      %271 = vmatprep.subr.mxu0 0.0
      %272 = vmatpush1.msra.mxu0 %v248
      %273 = vmatprep.subr.mxu0 0.0
      %274 = vmatpush1.msra.mxu0 %v249
      %275 = vmatprep.subr.mxu0 0.0
      %276 = vmatpush1.msra.mxu0 %v250
      %277 = vmatprep.subr.mxu0 0.0
      %278 = vmatpush1.msra.mxu0 %v251
      %279 = vmatprep.subr.mxu0 0.0
      %280 = vmatpush1.msra.mxu0 %v252
      %281 = vmatprep.subr.mxu0 0.0
      %282 = vmatpush1.msra.mxu0 %v253
      %283 = vmatprep.subr.mxu0 0.0
      %284 = vmatpush1.msra.mxu0 %v254
      %285 = vmatprep.subr.mxu0 0.0
      %286 = vmatpush1.msra.mxu0 %v255
      %287 = vmatprep.subr.mxu0 0.0
      %288 = vmatpush1.msra.mxu0 %v256
      %289 = vmatprep.subr.mxu0 0.0
      %290 = vmatpush1.msra.mxu0 %v257
      %291 = vmatprep.subr.mxu0 0.0
      %292 = vmatpush1.msra.mxu0 %v258
      %293 = vmatprep.subr.mxu0 0.0
      %294 = vmatpush1.msra.mxu0 %v259
      %295 = vmatprep.subr.mxu0 0.0
      %296 = vmatpush1.msra.mxu0 %v260
      %297 = vmatprep.subr.mxu0 0.0
      %298 = vmatpush1.msra.mxu0 %v261
      %299 = vmatprep.subr.mxu0 0.0
      %300 = vmatpush1.msra.mxu0 %v262
      %301 = vmatprep.subr.mxu0 0.0
      %302 = vmatpush1.msra.mxu0 %v263
      %303 = vmatprep.subr.mxu0 0.0
      %304 = vmatpush1.msra.mxu0 0.0
      %305 = vmatprep.subr.mxu0 0.0
      %306 = vmatpush1.msra.mxu0 0.0
      %307 = vmatprep.subr.mxu0 0.0
      %308 = vmatpush1.msra.mxu0 0.0
      %309 = vmatprep.subr.mxu0 0.0
      %310 = vmatpush1.msra.mxu0 0.0
      %311 = vmatprep.subr.mxu0 0.0
      %312 = vmatpush1.msra.mxu0 0.0
      %313 = vmatprep.subr.mxu0 0.0
      %314 = vmatpush1.msra.mxu0 0.0
      %315 = vmatprep.subr.mxu0 0.0
      %316 = vmatpush1.msra.mxu0 0.0
      %317 = vmatprep.subr.mxu0 0.0
      %318 = vmatpush1.msra.mxu0 0.0
      %319 = vmatprep.subr.mxu0 0.0
      %320 = vmatpush1.msra.mxu0 0.0
      %321 = vmatprep.subr.mxu0 0.0
      %322 = vmatpush1.msra.mxu0 0.0
      %323 = vmatprep.subr.mxu0 0.0
      %324 = vmatpush1.msra.mxu0 0.0
      %325 = vmatprep.subr.mxu0 0.0
      %326 = vmatpush1.msra.mxu0 0.0
      %327 = vmatprep.subr.mxu0 0.0
      %328 = vmatpush1.msra.mxu0 0.0
      %329 = vmatprep.subr.mxu0 0.0
      %330 = vmatpush1.msra.mxu0 0.0
      %331 = vmatprep.subr.mxu0 0.0
      %332 = vmatpush1.msra.mxu0 0.0
      %333 = vmatprep.subr.mxu0 0.0
      %334 = vmatpush1.msra.mxu0 0.0
      %335 = vmatprep.mubr.f32.mxu0 0.0
      %336 = vmatmul.mubr.f32.gmra.mrb[0].mxu0 %v247
      %v337 = vpop.f32.mrb[0].mxu0
      %v338 = vadd.f32 %v269, %v337
      %v339 = vpop.f32.mrb[0].mxu0
      %340 = vdwg.mxu0
      %v341 = vmax.f32 %v338, 0.0
      %v342 = vlaneseq
      %v343 = vand.u32 %v342, 127
      %vm344 = vcmp.lt.s32.totalorder %v343, 32
      %v345 = vsel %vm344, 1, 0
      %v346 = vcvt.s32.f32 %v345
      %v347 = vmul.f32 %v341, %v346
      %348 = vadd.xlane.f32.xlu0 %v347
      %v349 = vpop.xlane.xlu0 %348
      %v350 = vmul.f32 %v349, 0.03125
      %v351 = vsub.f32 %v341, %v350
      %v352 = vmul.f32 %v351, %v346
      %v353 = vmul.f32 %v352, %v352
      %354 = vadd.xlane.f32.xlu0 %v353
      %v355 = vpop.xlane.xlu0 %354
      %v356 = vmul.f32 %v355, 0.03125
      %v357 = vadd.f32 %v356, 1e-05
      %v358 = vrsqrt.pop %v357
      %v359 = vmul.f32 %v352, %v358
      %v360 = vld [vmem:[%s5] sm:$0x1]
      %v362 = vlaneseq
      %v363 = vshrl.u32 %v362, 7
      %v364 = vsub.s32 0, %v363
      %v365 = vrot.slane %v360, %v364
      %v367 = vmul.f32 %v359, %v365
      %v368 = vld [vmem:[%s6] sm:$0x1]
      %v370 = vlaneseq
      %v371 = vshrl.u32 %v370, 7
      %v372 = vsub.s32 0, %v371
      %v373 = vrot.slane %v368, %v372
      %v375 = vadd.f32 %v367, %v373
      %376 = vst [vmem:[#allocation12] sm:$0xff] %v375
    $region53: #{tpu_custom_call.1} parent=1 // pred_fallthru
      _
    // Predicated region
    $region54: #{tpu_custom_call.1} parent=1 // pred_check
      _
    $region55: #{tpu_custom_call.1} parent=1 // pred_check_branch
      %378 = sbr.rel (0) target = $region57
    $region56: #{tpu_custom_call.1} parent=1 // pred_region
      %s380 = ssub.s32 128, 128
      %381 = vsyncadd [#allocation6], %s380
      %s383 = sshll.u32 [#allocation12], 4
      %s384 = int_to_ptr.vmem [resolvable:$true] %s383
      %386 = dma.vmem_to_hbm [thread:$0]  %s384, 128, %s7, [#allocation6]
    $region57: #{tpu_custom_call.1} parent=1 // pred_fallthru
      _
    // Predicated region
    $region58: #{tpu_custom_call.1} parent=1 // pred_check
      _
    $region59: #{tpu_custom_call.1} parent=1 // pred_check_branch
      %388 = sbr.rel (0) target = $region61
    $region60: #{tpu_custom_call.1} parent=1 // pred_region
      %389 = dma.done [#allocation6], 128
    $region61: #{tpu_custom_call.1} parent=1 // pred_fallthru
      _
    %390 = vsyncpa [#allocation5], 1
    %391 = vsyncpa [#allocation8], 1
    %392 = vsyncpa [#allocation11], 1
    %393 = vsyncpa [#allocation6], 1

</llo_original>
